<compile_context>
chip_gen: v7x
topology: tpu7x:2x2x1
jax: 0.10.0
libtpu: 0.0.40
codegen_flags: <defaults>
</compile_context>

<pallas_src>
from functools import partial

import jax
import jax.numpy as jnp
from jax import lax
from jax.experimental import pallas as pl
from jax.experimental.pallas import tpu as pltpu


def xunits_kernel(x_ref, w_ref, b_ref, m_ref, o_ref, *, K, W):
    """One row-block of the flattened (N*C, H*W) problem.

    x_ref : (Rblk, H*W)  input slab (channels*batch on sublanes, spatial on lanes)
    w_ref : (Rblk, K*K)  per-row depthwise weights
    b_ref : (Rblk, 1)    per-row bias
    m_ref : (2K, H*W)    resident masks: rows [0,K) = row-validity, [K,2K) = col-validity
    o_ref : (Rblk, H*W)  output slab
    """
    pad = K // 2
    n = x_ref.shape[-1]

    xf = x_ref[...].astype(jnp.float32)        # (Rblk, n) — loaded once, reused for every tap
    wmat = w_ref[...].astype(jnp.float32)      # (Rblk, K*K)

    # Column-shifted (+ column-masked) copies: K-1 lane rolls on the XLU slot.
    z = []
    for kw in range(K):
        s = kw - pad
        if s == 0:
            z.append(xf)                                        # center column mask is all-ones
        else:
            shifted = pltpu.roll(xf, shift=(-s) % n, axis=1)
            z.append(shifted * m_ref[K + kw:K + kw + 1, :])     # col validity (zero padding)

    acc = None
    for kh in range(K):
        # Per-row-weighted sum over the K column-shifted copies for this kernel row.
        t = z[0] * wmat[:, kh * K:kh * K + 1]
        for kw in range(1, K):
            t = t + z[kw] * wmat[:, kh * K + kw:kh * K + kw + 1]
        s = (kh - pad) * W
        if s != 0:
            # One row roll (shift is a multiple of W, so it commutes with the column
            # masks already applied) followed by the row validity mask, which also
            # kills any full-array wraparound positions.
            t = pltpu.roll(t, shift=(-s) % n, axis=1) * m_ref[kh:kh + 1, :]
        acc = t if acc is None else acc + t

    zlin = acc + b_ref[...].astype(jnp.float32)        # (Rblk, n) + (Rblk, 1)
    a = 0.5 * jnp.tanh(0.5 * zlin) + 0.5               # sigmoid; tanh goes to the EUP slot
    o_ref[...] = (xf * a).astype(o_ref.dtype)          # gate: r = x * sigmoid(conv(x))


def xunits_forward(x, weight, bias, *, row_block=512):
    """x: (N, C, H, W); weight: (C, K, K); bias: (C,). Returns x * sigmoid(dwconv(x))."""
    N, C, H, W = x.shape
    K = weight.shape[-1]
    pad = K // 2
    n = H * W
    # Lane-dense layout assumption (perf only; H*W=256 here). Other sizes still
    # compute correctly but stores become lane-masked.
    R = N * C

    # Pure reshapes of contiguous trailing dims — no data movement, no pad pass.
    xf = x.reshape(R, n)
    # Replicate per-channel params across the batch (tiny: R x (K*K+1) floats).
    w2 = jnp.broadcast_to(weight.reshape(1, C, K * K), (N, C, K * K)).reshape(R, K * K)
    b2 = jnp.broadcast_to(bias.reshape(1, C, 1), (N, C, 1)).reshape(R, 1)

    # Host-precomputed boundary masks (zero-padding semantics), resident in VMEM.
    p_idx = jnp.arange(n, dtype=jnp.int32)
    h_idx = p_idx // W
    w_idx = p_idx % W
    row_masks = jnp.stack(
        [((h_idx >= (pad - kh)) & (h_idx <= (H - 1 + pad - kh))).astype(jnp.float32)
         for kh in range(K)])
    col_masks = jnp.stack(
        [((w_idx >= (pad - kw)) & (w_idx <= (W - 1 + pad - kw))).astype(jnp.float32)
         for kw in range(K)])
    masks = jnp.concatenate([row_masks, col_masks], axis=0)      # (2K, n)

    # Row blocking: fill the 8 f32 sublanes; single grid step at small sizes,
    # blocked at large sizes so double-buffered in+out slabs stay inside VMEM.
    R_blk = min(-(-R // 8) * 8, row_block)
    R_pad = -(-R // R_blk) * R_blk
    if R_pad != R:
        xf = jnp.pad(xf, ((0, R_pad - R), (0, 0)))
        w2 = jnp.pad(w2, ((0, R_pad - R), (0, 0)))
        b2 = jnp.pad(b2, ((0, R_pad - R), (0, 0)))
    num_blocks = R_pad // R_blk
    # Tiny grids get no benefit from cross-core sharding (v7x); large ones do.
    semantics = ("parallel",) if num_blocks >= 8 else ("arbitrary",)

    itemsize = jnp.dtype(x.dtype).itemsize
    cost = pl.CostEstimate(
        flops=2 * K * K * N * C * H * W,
        transcendentals=N * C * H * W,
        bytes_accessed=2 * R_pad * n * itemsize + (R_pad * (K * K + 1) + 2 * K * n) * 4,
    )

    out = pl.pallas_call(
        partial(xunits_kernel, K=K, W=W),
        out_shape=jax.ShapeDtypeStruct((R_pad, n), x.dtype),
        grid=(num_blocks,),
        in_specs=[
            pl.BlockSpec((R_blk, n), lambda i: (i, 0)),        # x slab per row block
            pl.BlockSpec((R_blk, K * K), lambda i: (i, 0)),    # weights per row block
            pl.BlockSpec((R_blk, 1), lambda i: (i, 0)),        # bias per row block
            pl.BlockSpec((2 * K, n), lambda i: (0, 0)),        # masks: resident
        ],
        out_specs=pl.BlockSpec((R_blk, n), lambda i: (i, 0)),
        compiler_params=pltpu.CompilerParams(dimension_semantics=semantics),
        cost_estimate=cost,
    )(xf, w2, b2, masks)

    return out[:R].reshape(N, C, H, W)


def xunits_reference(x, weight, bias):
    """Pure-JAX reference (depthwise conv == grouped conv with groups=C)."""
    C = x.shape[1]
    K = weight.shape[-1]
    w4 = weight.reshape(C, 1, K, K)
    conv = lax.conv_general_dilated(
        x, w4,
        window_strides=(1, 1),
        padding=[(K // 2, K // 2), (K // 2, K // 2)],
        feature_group_count=C,
        dimension_numbers=("NCHW", "OIHW", "NCHW"),
    ) + bias.reshape(1, C, 1, 1)
    return x * jax.nn.sigmoid(conv)


if __name__ == "__main__":
    # Small shapes consistent with the module: num_features=4, kernel_size=5.
    N, C, H, W = 2, 4, 16, 16
    K = 5

    key = jax.random.PRNGKey(0)
    k_x, k_w, k_b = jax.random.split(key, 3)

    x = jax.random.normal(k_x, (N, C, H, W), dtype=jnp.float32)
    # Deterministic synthetic parameter init (Conv2d-like scale).
    fan_in = K * K  # depthwise: in_channels_per_group * K * K
    bound = 1.0 / (fan_in ** 0.5)
    weight = jax.random.uniform(k_w, (C, K, K), jnp.float32, -bound, bound)
    bias = jax.random.uniform(k_b, (C,), jnp.float32, -bound, bound)

    out = jax.block_until_ready(xunits_forward(x, weight, bias))

    ref = xunits_reference(x, weight, bias)
    assert out.shape == (N, C, H, W)
    assert jnp.allclose(out, ref, atol=2e-5, rtol=1e-4), "mismatch vs reference"

    print("KERNEL_OK")
</pallas_src>

<mosaic_0001>
module attributes {stable_mosaic.version = 11 : i64} {
  func.func @xunits_kernel(%arg0: i32, %arg1: memref<8x256xf32, #tpu.memory_space<vmem>>, %arg2: memref<8x25xf32, #tpu.memory_space<vmem>>, %arg3: memref<8x1xf32, #tpu.memory_space<vmem>>, %arg4: memref<10x256xf32, #tpu.memory_space<vmem>>, %arg5: memref<8x256xf32, #tpu.memory_space<vmem>>) attributes {dimension_semantics = [#tpu.dimension_semantics<arbitrary>], iteration_bounds = array<i64: 1>, scalar_prefetch = 0 : i64, scratch_operands = 0 : i64, tpu.core_type = #tpu.core_type<tc>, window_params = [{transform_indices = @transform_0, window_bounds = array<i64: 8, 256>}, {transform_indices = @transform_1, window_bounds = array<i64: 8, 25>}, {transform_indices = @transform_2, window_bounds = array<i64: 8, 1>}, {pipeline_mode = #tpu.pipeline_mode<synchronous>, transform_indices = @transform_3, window_bounds = array<i64: 10, 256>}, {transform_indices = @transform_4, window_bounds = array<i64: 8, 256>}]} {
    %c0 = arith.constant 0 : index
    %c0_0 = arith.constant 0 : index
    %0 = vector.load %arg1[%c0, %c0_0] : memref<8x256xf32, #tpu.memory_space<vmem>>, vector<8x256xf32>
    %c0_1 = arith.constant 0 : index
    %c0_2 = arith.constant 0 : index
    %1 = vector.load %arg2[%c0_1, %c0_2] : memref<8x25xf32, #tpu.memory_space<vmem>>, vector<8x25xf32>
    %c2_i32 = arith.constant 2 : i32
    %2 = tpu.dynamic_rotate %0 by %c2_i32 dim 1 : vector<8x256xf32>, i32 -> vector<8x256xf32>
    %c5 = arith.constant 5 : index
    %c0_3 = arith.constant 0 : index
    %3 = vector.load %arg4[%c5, %c0_3] : memref<10x256xf32, #tpu.memory_space<vmem>>, vector<1x256xf32>
    %4 = vector.broadcast %3 : vector<1x256xf32> to vector<8x256xf32>
    %5 = arith.mulf %2, %4 : vector<8x256xf32>
    %c1_i32 = arith.constant 1 : i32
    %6 = tpu.dynamic_rotate %0 by %c1_i32 dim 1 : vector<8x256xf32>, i32 -> vector<8x256xf32>
    %c6 = arith.constant 6 : index
    %c0_4 = arith.constant 0 : index
    %7 = vector.load %arg4[%c6, %c0_4] : memref<10x256xf32, #tpu.memory_space<vmem>>, vector<1x256xf32>
    %8 = vector.broadcast %7 : vector<1x256xf32> to vector<8x256xf32>
    %9 = arith.mulf %6, %8 : vector<8x256xf32>
    %c255_i32 = arith.constant 255 : i32
    %10 = tpu.dynamic_rotate %0 by %c255_i32 dim 1 : vector<8x256xf32>, i32 -> vector<8x256xf32>
    %c8 = arith.constant 8 : index
    %c0_5 = arith.constant 0 : index
    %11 = vector.load %arg4[%c8, %c0_5] : memref<10x256xf32, #tpu.memory_space<vmem>>, vector<1x256xf32>
    %12 = vector.broadcast %11 : vector<1x256xf32> to vector<8x256xf32>
    %13 = arith.mulf %10, %12 : vector<8x256xf32>
    %c254_i32 = arith.constant 254 : i32
    %14 = tpu.dynamic_rotate %0 by %c254_i32 dim 1 : vector<8x256xf32>, i32 -> vector<8x256xf32>
    %c9 = arith.constant 9 : index
    %c0_6 = arith.constant 0 : index
    %15 = vector.load %arg4[%c9, %c0_6] : memref<10x256xf32, #tpu.memory_space<vmem>>, vector<1x256xf32>
    %16 = vector.broadcast %15 : vector<1x256xf32> to vector<8x256xf32>
    %17 = arith.mulf %14, %16 : vector<8x256xf32>
    %18 = vector.extract_strided_slice %1 {offsets = [0, 0], sizes = [8, 1], strides = [1, 1]} : vector<8x25xf32> to vector<8x1xf32>
    %19 = vector.broadcast %18 : vector<8x1xf32> to vector<8x256xf32>
    %20 = arith.mulf %5, %19 : vector<8x256xf32>
    %21 = vector.extract_strided_slice %1 {offsets = [0, 1], sizes = [8, 1], strides = [1, 1]} : vector<8x25xf32> to vector<8x1xf32>
    %22 = vector.broadcast %21 : vector<8x1xf32> to vector<8x256xf32>
    %23 = arith.mulf %9, %22 : vector<8x256xf32>
    %24 = arith.addf %20, %23 : vector<8x256xf32>
    %25 = vector.extract_strided_slice %1 {offsets = [0, 2], sizes = [8, 1], strides = [1, 1]} : vector<8x25xf32> to vector<8x1xf32>
    %26 = vector.broadcast %25 : vector<8x1xf32> to vector<8x256xf32>
    %27 = arith.mulf %0, %26 : vector<8x256xf32>
    %28 = arith.addf %24, %27 : vector<8x256xf32>
    %29 = vector.extract_strided_slice %1 {offsets = [0, 3], sizes = [8, 1], strides = [1, 1]} : vector<8x25xf32> to vector<8x1xf32>
    %30 = vector.broadcast %29 : vector<8x1xf32> to vector<8x256xf32>
    %31 = arith.mulf %13, %30 : vector<8x256xf32>
    %32 = arith.addf %28, %31 : vector<8x256xf32>
    %33 = vector.extract_strided_slice %1 {offsets = [0, 4], sizes = [8, 1], strides = [1, 1]} : vector<8x25xf32> to vector<8x1xf32>
    %34 = vector.broadcast %33 : vector<8x1xf32> to vector<8x256xf32>
    %35 = arith.mulf %17, %34 : vector<8x256xf32>
    %36 = arith.addf %32, %35 : vector<8x256xf32>
    %c32_i32 = arith.constant 32 : i32
    %37 = tpu.dynamic_rotate %36 by %c32_i32 dim 1 : vector<8x256xf32>, i32 -> vector<8x256xf32>
    %c0_7 = arith.constant 0 : index
    %c0_8 = arith.constant 0 : index
    %38 = vector.load %arg4[%c0_7, %c0_8] : memref<10x256xf32, #tpu.memory_space<vmem>>, vector<1x256xf32>
    %39 = vector.broadcast %38 : vector<1x256xf32> to vector<8x256xf32>
    %40 = arith.mulf %37, %39 : vector<8x256xf32>
    %41 = vector.extract_strided_slice %1 {offsets = [0, 5], sizes = [8, 1], strides = [1, 1]} : vector<8x25xf32> to vector<8x1xf32>
    %42 = vector.broadcast %41 : vector<8x1xf32> to vector<8x256xf32>
    %43 = arith.mulf %5, %42 : vector<8x256xf32>
    %44 = vector.extract_strided_slice %1 {offsets = [0, 6], sizes = [8, 1], strides = [1, 1]} : vector<8x25xf32> to vector<8x1xf32>
    %45 = vector.broadcast %44 : vector<8x1xf32> to vector<8x256xf32>
    %46 = arith.mulf %9, %45 : vector<8x256xf32>
    %47 = arith.addf %43, %46 : vector<8x256xf32>
    %48 = vector.extract_strided_slice %1 {offsets = [0, 7], sizes = [8, 1], strides = [1, 1]} : vector<8x25xf32> to vector<8x1xf32>
    %49 = vector.broadcast %48 : vector<8x1xf32> to vector<8x256xf32>
    %50 = arith.mulf %0, %49 : vector<8x256xf32>
    %51 = arith.addf %47, %50 : vector<8x256xf32>
    %52 = vector.extract_strided_slice %1 {offsets = [0, 8], sizes = [8, 1], strides = [1, 1]} : vector<8x25xf32> to vector<8x1xf32>
    %53 = vector.broadcast %52 : vector<8x1xf32> to vector<8x256xf32>
    %54 = arith.mulf %13, %53 : vector<8x256xf32>
    %55 = arith.addf %51, %54 : vector<8x256xf32>
    %56 = vector.extract_strided_slice %1 {offsets = [0, 9], sizes = [8, 1], strides = [1, 1]} : vector<8x25xf32> to vector<8x1xf32>
    %57 = vector.broadcast %56 : vector<8x1xf32> to vector<8x256xf32>
    %58 = arith.mulf %17, %57 : vector<8x256xf32>
    %59 = arith.addf %55, %58 : vector<8x256xf32>
    %c16_i32 = arith.constant 16 : i32
    %60 = tpu.dynamic_rotate %59 by %c16_i32 dim 1 : vector<8x256xf32>, i32 -> vector<8x256xf32>
    %c1 = arith.constant 1 : index
    %c0_9 = arith.constant 0 : index
    %61 = vector.load %arg4[%c1, %c0_9] : memref<10x256xf32, #tpu.memory_space<vmem>>, vector<1x256xf32>
    %62 = vector.broadcast %61 : vector<1x256xf32> to vector<8x256xf32>
    %63 = arith.mulf %60, %62 : vector<8x256xf32>
    %64 = arith.addf %40, %63 : vector<8x256xf32>
    %65 = vector.extract_strided_slice %1 {offsets = [0, 10], sizes = [8, 1], strides = [1, 1]} : vector<8x25xf32> to vector<8x1xf32>
    %66 = vector.broadcast %65 : vector<8x1xf32> to vector<8x256xf32>
    %67 = arith.mulf %5, %66 : vector<8x256xf32>
    %68 = vector.extract_strided_slice %1 {offsets = [0, 11], sizes = [8, 1], strides = [1, 1]} : vector<8x25xf32> to vector<8x1xf32>
    %69 = vector.broadcast %68 : vector<8x1xf32> to vector<8x256xf32>
    %70 = arith.mulf %9, %69 : vector<8x256xf32>
    %71 = arith.addf %67, %70 : vector<8x256xf32>
    %72 = vector.extract_strided_slice %1 {offsets = [0, 12], sizes = [8, 1], strides = [1, 1]} : vector<8x25xf32> to vector<8x1xf32>
    %73 = vector.broadcast %72 : vector<8x1xf32> to vector<8x256xf32>
    %74 = arith.mulf %0, %73 : vector<8x256xf32>
    %75 = arith.addf %71, %74 : vector<8x256xf32>
    %76 = vector.extract_strided_slice %1 {offsets = [0, 13], sizes = [8, 1], strides = [1, 1]} : vector<8x25xf32> to vector<8x1xf32>
    %77 = vector.broadcast %76 : vector<8x1xf32> to vector<8x256xf32>
    %78 = arith.mulf %13, %77 : vector<8x256xf32>
    %79 = arith.addf %75, %78 : vector<8x256xf32>
    %80 = vector.extract_strided_slice %1 {offsets = [0, 14], sizes = [8, 1], strides = [1, 1]} : vector<8x25xf32> to vector<8x1xf32>
    %81 = vector.broadcast %80 : vector<8x1xf32> to vector<8x256xf32>
    %82 = arith.mulf %17, %81 : vector<8x256xf32>
    %83 = arith.addf %79, %82 : vector<8x256xf32>
    %84 = arith.addf %64, %83 : vector<8x256xf32>
    %85 = vector.extract_strided_slice %1 {offsets = [0, 15], sizes = [8, 1], strides = [1, 1]} : vector<8x25xf32> to vector<8x1xf32>
    %86 = vector.broadcast %85 : vector<8x1xf32> to vector<8x256xf32>
    %87 = arith.mulf %5, %86 : vector<8x256xf32>
    %88 = vector.extract_strided_slice %1 {offsets = [0, 16], sizes = [8, 1], strides = [1, 1]} : vector<8x25xf32> to vector<8x1xf32>
    %89 = vector.broadcast %88 : vector<8x1xf32> to vector<8x256xf32>
    %90 = arith.mulf %9, %89 : vector<8x256xf32>
    %91 = arith.addf %87, %90 : vector<8x256xf32>
    %92 = vector.extract_strided_slice %1 {offsets = [0, 17], sizes = [8, 1], strides = [1, 1]} : vector<8x25xf32> to vector<8x1xf32>
    %93 = vector.broadcast %92 : vector<8x1xf32> to vector<8x256xf32>
    %94 = arith.mulf %0, %93 : vector<8x256xf32>
    %95 = arith.addf %91, %94 : vector<8x256xf32>
    %96 = vector.extract_strided_slice %1 {offsets = [0, 18], sizes = [8, 1], strides = [1, 1]} : vector<8x25xf32> to vector<8x1xf32>
    %97 = vector.broadcast %96 : vector<8x1xf32> to vector<8x256xf32>
    %98 = arith.mulf %13, %97 : vector<8x256xf32>
    %99 = arith.addf %95, %98 : vector<8x256xf32>
    %100 = vector.extract_strided_slice %1 {offsets = [0, 19], sizes = [8, 1], strides = [1, 1]} : vector<8x25xf32> to vector<8x1xf32>
    %101 = vector.broadcast %100 : vector<8x1xf32> to vector<8x256xf32>
    %102 = arith.mulf %17, %101 : vector<8x256xf32>
    %103 = arith.addf %99, %102 : vector<8x256xf32>
    %c240_i32 = arith.constant 240 : i32
    %104 = tpu.dynamic_rotate %103 by %c240_i32 dim 1 : vector<8x256xf32>, i32 -> vector<8x256xf32>
    %c3 = arith.constant 3 : index
    %c0_10 = arith.constant 0 : index
    %105 = vector.load %arg4[%c3, %c0_10] : memref<10x256xf32, #tpu.memory_space<vmem>>, vector<1x256xf32>
    %106 = vector.broadcast %105 : vector<1x256xf32> to vector<8x256xf32>
    %107 = arith.mulf %104, %106 : vector<8x256xf32>
    %108 = arith.addf %84, %107 : vector<8x256xf32>
    %109 = vector.extract_strided_slice %1 {offsets = [0, 20], sizes = [8, 1], strides = [1, 1]} : vector<8x25xf32> to vector<8x1xf32>
    %110 = vector.broadcast %109 : vector<8x1xf32> to vector<8x256xf32>
    %111 = arith.mulf %5, %110 : vector<8x256xf32>
    %112 = vector.extract_strided_slice %1 {offsets = [0, 21], sizes = [8, 1], strides = [1, 1]} : vector<8x25xf32> to vector<8x1xf32>
    %113 = vector.broadcast %112 : vector<8x1xf32> to vector<8x256xf32>
    %114 = arith.mulf %9, %113 : vector<8x256xf32>
    %115 = arith.addf %111, %114 : vector<8x256xf32>
    %116 = vector.extract_strided_slice %1 {offsets = [0, 22], sizes = [8, 1], strides = [1, 1]} : vector<8x25xf32> to vector<8x1xf32>
    %117 = vector.broadcast %116 : vector<8x1xf32> to vector<8x256xf32>
    %118 = arith.mulf %0, %117 : vector<8x256xf32>
    %119 = arith.addf %115, %118 : vector<8x256xf32>
    %120 = vector.extract_strided_slice %1 {offsets = [0, 23], sizes = [8, 1], strides = [1, 1]} : vector<8x25xf32> to vector<8x1xf32>
    %121 = vector.broadcast %120 : vector<8x1xf32> to vector<8x256xf32>
    %122 = arith.mulf %13, %121 : vector<8x256xf32>
    %123 = arith.addf %119, %122 : vector<8x256xf32>
    %124 = vector.extract_strided_slice %1 {offsets = [0, 24], sizes = [8, 1], strides = [1, 1]} : vector<8x25xf32> to vector<8x1xf32>
    %125 = vector.broadcast %124 : vector<8x1xf32> to vector<8x256xf32>
    %126 = arith.mulf %17, %125 : vector<8x256xf32>
    %127 = arith.addf %123, %126 : vector<8x256xf32>
    %c224_i32 = arith.constant 224 : i32
    %128 = tpu.dynamic_rotate %127 by %c224_i32 dim 1 : vector<8x256xf32>, i32 -> vector<8x256xf32>
    %c4 = arith.constant 4 : index
    %c0_11 = arith.constant 0 : index
    %129 = vector.load %arg4[%c4, %c0_11] : memref<10x256xf32, #tpu.memory_space<vmem>>, vector<1x256xf32>
    %130 = vector.broadcast %129 : vector<1x256xf32> to vector<8x256xf32>
    %131 = arith.mulf %128, %130 : vector<8x256xf32>
    %132 = arith.addf %108, %131 : vector<8x256xf32>
    %c0_12 = arith.constant 0 : index
    %c0_13 = arith.constant 0 : index
    %133 = vector.load %arg3[%c0_12, %c0_13] : memref<8x1xf32, #tpu.memory_space<vmem>>, vector<8x1xf32>
    %134 = vector.broadcast %133 : vector<8x1xf32> to vector<8x256xf32>
    %135 = arith.addf %132, %134 : vector<8x256xf32>
    %cst = arith.constant 5.000000e-01 : f32
    %136 = vector.broadcast %cst : f32 to vector<8x256xf32>
    %137 = arith.mulf %136, %135 : vector<8x256xf32>
    %138 = math.tanh %137 : vector<8x256xf32>
    %cst_14 = arith.constant 5.000000e-01 : f32
    %139 = vector.broadcast %cst_14 : f32 to vector<8x256xf32>
    %140 = arith.mulf %139, %138 : vector<8x256xf32>
    %cst_15 = arith.constant 5.000000e-01 : f32
    %141 = vector.broadcast %cst_15 : f32 to vector<8x256xf32>
    %142 = arith.addf %140, %141 : vector<8x256xf32>
    %143 = arith.mulf %0, %142 : vector<8x256xf32>
    %c0_16 = arith.constant 0 : index
    %c0_17 = arith.constant 0 : index
    %144 = vector.load %arg5[%c0_16, %c0_17] : memref<8x256xf32, #tpu.memory_space<vmem>>, vector<8x256xf32>
    tpu.vector_store %arg5[%c0_16, %c0_17], %143 {strides = array<i32>} : memref<8x256xf32, #tpu.memory_space<vmem>>, vector<8x256xf32>,
    return
  }
  func.func @transform_0(%arg0: i32) -> (i32, i32) {
    %c0_i32 = arith.constant 0 : i32
    %c0_i32_0 = arith.constant 0 : i32
    return %arg0, %c0_i32 : i32, i32
  }
  func.func @transform_1(%arg0: i32) -> (i32, i32) {
    %c0_i32 = arith.constant 0 : i32
    %c0_i32_0 = arith.constant 0 : i32
    return %arg0, %c0_i32 : i32, i32
  }
  func.func @transform_2(%arg0: i32) -> (i32, i32) {
    %c0_i32 = arith.constant 0 : i32
    %c0_i32_0 = arith.constant 0 : i32
    return %arg0, %c0_i32 : i32, i32
  }
  func.func @transform_3(%arg0: i32) -> (i32, i32) {
    %c0_i32 = arith.constant 0 : i32
    %c0_i32_0 = arith.constant 0 : i32
    %c0_i32_1 = arith.constant 0 : i32
    return %c0_i32, %c0_i32_0 : i32, i32
  }
  func.func @transform_4(%arg0: i32) -> (i32, i32) {
    %c0_i32 = arith.constant 0 : i32
    %c0_i32_0 = arith.constant 0 : i32
    return %arg0, %c0_i32 : i32, i32
  }
}

</mosaic_0001>

<llo_original>
// kernel: tpu_custom_call.1
$region0: #{tpu_custom_call.1}
  #allocation0 [shape = 'u32[]', space=smem, size = 0x4, offset = 0x4, fixed_abs, tag = 'smem constant byte address 0x4 - core index']
  #allocation1 [shape = 'u32[144,128]{1,0:T(1,128)}', space=vmem, size = 0x12000, scoped, tag = 'internal scratch']
  %s0 = inlined_call_operand.hbm [shape: f32[8,256], index: 0, kind: input, shape index: {}]
  %s1 = inlined_call_operand.vmem [shape: f32[8,25], index: 1, kind: input, shape index: {}]
  %s2 = inlined_call_operand.vmem [shape: f32[8,1], index: 2, kind: input, shape index: {}]
  %s3 = inlined_call_operand.hbm [shape: f32[10,256], index: 3, kind: input, shape index: {}]
  %s4 = inlined_call_operand.hbm [shape: f32[8,256], index: 4, kind: output, shape index: {}]
  %s5 = sld [smem:[#allocation0]]
  $region34: #{tpu_custom_call.1} parent=0
    _
  %s7 = ssub.s32 1, %s5
  %s8 = scalar_select 0, %s7, %s5
  $region1: #{tpu_custom_call.1} parent=0
    #allocation2 [shape = 'u8[8192]{0}', space=vmem, size = 0x2000, scoped, tag = 'input window, operand 0, single buffered']
    #allocation3 [shape = 's32[1]{0}', space=sflag, size = 0x4, scoped, tag = 'scoped memory for tpu_custom_call.1']
    #allocation4 [shape = 's32[1]{0}', space=sflag, size = 0x4, scoped, tag = 'scoped memory for tpu_custom_call.1']
    #allocation5 [shape = 'u8[16384]{0}', space=vmem, size = 0x4000, scoped, tag = 'input window, operand 3, single buffered']
    #allocation6 [shape = 's32[1]{0}', space=sflag, size = 0x4, scoped, tag = 'scoped memory for tpu_custom_call.1']
    #allocation7 [shape = 'u8[8192]{0}', space=vmem, size = 0x2000, scoped, tag = 'output window, operand 0, single buffered']
    %9 = vsyncpa [#allocation3], 0
    %10 = vsyncpa [#allocation6], 0
    %11 = vsyncpa [#allocation4], 0
    // Predicated region
    $region2: #{tpu_custom_call.1} parent=1 // pred_check
      _
    $region3: #{tpu_custom_call.1} parent=1 // pred_check_branch
      %13 = sbr.rel (0) target = $region5
    $region4: #{tpu_custom_call.1} parent=1 // pred_region
      %s15 = ssub.s32 256, 256
      %16 = vsyncadd [#allocation3], %s15
      %s18 = sshll.u32 [#allocation2], 4
      %s19 = int_to_ptr.vmem [resolvable:$true] %s18
      %21 = dma.hbm_to_vmem [thread:$0]  %s0, 256, %s19, [#allocation3]
    $region5: #{tpu_custom_call.1} parent=1 // pred_fallthru
      _
    // Predicated region
    $region6: #{tpu_custom_call.1} parent=1 // pred_check
      _
    $region7: #{tpu_custom_call.1} parent=1 // pred_check_branch
      %23 = sbr.rel (0) target = $region9
    $region8: #{tpu_custom_call.1} parent=1 // pred_region
      _
    $region9: #{tpu_custom_call.1} parent=1 // pred_fallthru
      _
    // Predicated region
    $region10: #{tpu_custom_call.1} parent=1 // pred_check
      _
    $region11: #{tpu_custom_call.1} parent=1 // pred_check_branch
      %25 = sbr.rel (0) target = $region13
    $region12: #{tpu_custom_call.1} parent=1 // pred_region
      _
    $region13: #{tpu_custom_call.1} parent=1 // pred_fallthru
      _
    // Predicated region
    $region14: #{tpu_custom_call.1} parent=1 // pred_check
      _
    $region15: #{tpu_custom_call.1} parent=1 // pred_check_branch
      %27 = sbr.rel (0) target = $region17
    $region16: #{tpu_custom_call.1} parent=1 // pred_region
      %s29 = ssub.s32 512, 512
      %30 = vsyncadd [#allocation6], %s29
      %s31 = sshll.u32 [#allocation5], 4
      %s32 = int_to_ptr.vmem [resolvable:$true] %s31
      %37 = dma.hbm_to_vmem [thread:$0]  %s3, 512, %s32, [#allocation6], 256, 256, 16
    $region17: #{tpu_custom_call.1} parent=1 // pred_fallthru
      _
    // Predicated region
    $region18: #{tpu_custom_call.1} parent=1 // pred_check
      _
    $region19: #{tpu_custom_call.1} parent=1 // pred_check_branch
      %39 = sbr.rel (0) target = $region21
    $region20: #{tpu_custom_call.1} parent=1 // pred_region
      %40 = dma.done [#allocation3], 256
    $region21: #{tpu_custom_call.1} parent=1 // pred_fallthru
      _
    // Predicated region
    $region22: #{tpu_custom_call.1} parent=1 // pred_check
      _
    $region23: #{tpu_custom_call.1} parent=1 // pred_check_branch
      %42 = sbr.rel (0) target = $region25
    $region24: #{tpu_custom_call.1} parent=1 // pred_region
      %43 = dma.done [#allocation6], 512
    $region25: #{tpu_custom_call.1} parent=1 // pred_fallthru
      _
    %v44 = vld [vmem:[#allocation2] sm:$0xff]
    %v45 = vld [vmem:[#allocation2 + $0x8] sm:$0xff]
    %v46 = vld [vmem:[%s1] sm:$0xff]
    %47 = vrot.lane.b32.xlu0 %v44, 2
    %v48 = vpop.permute.xlu0 %47
    %49 = vrot.lane.b32.xlu0 %v45, 2
    %v50 = vpop.permute.xlu0 %49
    %v51 = vlaneseq
    %v52 = vand.u32 %v51, 127
    %vm53 = vcmp.lt.s32.totalorder %v52, 2
    %v54 = vsel %vm53, %v48, %v50
    %v55 = vsel %vm53, %v50, %v48
    %s56 = scalar_lea.vmem [#allocation5], 5
    %v57 = vld [vmem:[%s56] ss:$8 sm:$0x3]
    %v59 = vlaneseq
    %v60 = vshrl.u32 %v59, 7
    %v61 = vsub.s32 0, %v60
    %v62 = vrot.slane %v57, %v61
    %v63 = vlaneseq
    %v64 = vshrl.u32 %v63, 7
    %v65 = vsub.s32 1, %v64
    %v66 = vrot.slane %v57, %v65
    %v69 = vmul.f32 %v55, %v62
    %v70 = vmul.f32 %v54, %v66
    %71 = vrot.lane.b32.xlu0 %v44, 1
    %v72 = vpop.permute.xlu0 %71
    %73 = vrot.lane.b32.xlu0 %v45, 1
    %v74 = vpop.permute.xlu0 %73
    %vm75 = vcmp.lt.s32.totalorder %v52, 1
    %v76 = vsel %vm75, %v72, %v74
    %v77 = vsel %vm75, %v74, %v72
    %s78 = scalar_lea.vmem [#allocation5], 6
    %v79 = vld [vmem:[%s78] ss:$8 sm:$0x3]
    %v81 = vlaneseq
    %v82 = vshrl.u32 %v81, 7
    %v83 = vsub.s32 0, %v82
    %v84 = vrot.slane %v79, %v83
    %v85 = vlaneseq
    %v86 = vshrl.u32 %v85, 7
    %v87 = vsub.s32 1, %v86
    %v88 = vrot.slane %v79, %v87
    %v91 = vmul.f32 %v77, %v84
    %v92 = vmul.f32 %v76, %v88
    %93 = vrot.lane.b32.xlu0 %v44, 127
    %v94 = vpop.permute.xlu0 %93
    %95 = vrot.lane.b32.xlu0 %v45, 127
    %v96 = vpop.permute.xlu0 %95
    %vm97 = vcmp.lt.s32.totalorder %v52, 127
    %v98 = vsel %vm97, %v94, %v96
    %v99 = vsel %vm97, %v96, %v94
    %s100 = scalar_lea.vmem [#allocation5], 16
    %v101 = vld [vmem:[%s100] ss:$8 sm:$0x3]
    %v103 = vlaneseq
    %v104 = vshrl.u32 %v103, 7
    %v105 = vsub.s32 0, %v104
    %v106 = vrot.slane %v101, %v105
    %v107 = vlaneseq
    %v108 = vshrl.u32 %v107, 7
    %v109 = vsub.s32 1, %v108
    %v110 = vrot.slane %v101, %v109
    %v113 = vmul.f32 %v98, %v106
    %v114 = vmul.f32 %v99, %v110
    %115 = vrot.lane.b32.xlu0 %v44, 126
    %v116 = vpop.permute.xlu0 %115
    %117 = vrot.lane.b32.xlu0 %v45, 126
    %v118 = vpop.permute.xlu0 %117
    %vm119 = vcmp.lt.s32.totalorder %v52, 126
    %v120 = vsel %vm119, %v116, %v118
    %v121 = vsel %vm119, %v118, %v116
    %s122 = scalar_lea.vmem [#allocation5], 17
    %v123 = vld [vmem:[%s122] ss:$8 sm:$0x3]
    %v125 = vlaneseq
    %v126 = vshrl.u32 %v125, 7
    %v127 = vsub.s32 0, %v126
    %v128 = vrot.slane %v123, %v127
    %v129 = vlaneseq
    %v130 = vshrl.u32 %v129, 7
    %v131 = vsub.s32 1, %v130
    %v132 = vrot.slane %v123, %v131
    %v135 = vmul.f32 %v120, %v128
    %v136 = vmul.f32 %v121, %v132
    %138 = vset.pattern.permute.xlu0 0
    %139 = vperm.xlu0 %138, %v46
    %v140 = vpop.permute.xlu0 %139
    %v142 = vmul.f32 %v69, %v140
    %v143 = vmul.f32 %v70, %v140
    %144 = vset.pattern.permute.xlu0 1
    %145 = vperm.xlu0 %144, %v46
    %v146 = vpop.permute.xlu0 %145
    %v148 = vmul.f32 %v91, %v146
    %v149 = vmul.f32 %v92, %v146
    %v150 = vadd.f32 %v142, %v148
    %v151 = vadd.f32 %v143, %v149
    %152 = vset.pattern.permute.xlu0 2
    %153 = vperm.xlu0 %152, %v46
    %v154 = vpop.permute.xlu0 %153
    %v156 = vmul.f32 %v44, %v154
    %v157 = vmul.f32 %v45, %v154
    %v158 = vadd.f32 %v150, %v156
    %v159 = vadd.f32 %v151, %v157
    %160 = vset.pattern.permute.xlu0 3
    %161 = vperm.xlu0 %160, %v46
    %v162 = vpop.permute.xlu0 %161
    %v164 = vmul.f32 %v113, %v162
    %v165 = vmul.f32 %v114, %v162
    %v166 = vadd.f32 %v158, %v164
    %v167 = vadd.f32 %v159, %v165
    %168 = vset.pattern.permute.xlu0 4
    %169 = vperm.xlu0 %168, %v46
    %v170 = vpop.permute.xlu0 %169
    %v172 = vmul.f32 %v135, %v170
    %v173 = vmul.f32 %v136, %v170
    %v174 = vadd.f32 %v166, %v172
    %v175 = vadd.f32 %v167, %v173
    %176 = vrot.lane.b32.xlu0 %v174, 32
    %v177 = vpop.permute.xlu0 %176
    %178 = vrot.lane.b32.xlu0 %v175, 32
    %v179 = vpop.permute.xlu0 %178
    %vm180 = vcmp.lt.s32.totalorder %v52, 32
    %v181 = vsel %vm180, %v177, %v179
    %v182 = vsel %vm180, %v179, %v177
    %v183 = vld [vmem:[#allocation5] ss:$8 sm:$0x3]
    %v185 = vlaneseq
    %v186 = vshrl.u32 %v185, 7
    %v187 = vsub.s32 0, %v186
    %v188 = vrot.slane %v183, %v187
    %v189 = vlaneseq
    %v190 = vshrl.u32 %v189, 7
    %v191 = vsub.s32 1, %v190
    %v192 = vrot.slane %v183, %v191
    %v195 = vmul.f32 %v182, %v188
    %v196 = vmul.f32 %v181, %v192
    %197 = vset.pattern.permute.xlu0 5
    %198 = vperm.xlu0 %197, %v46
    %v199 = vpop.permute.xlu0 %198
    %v201 = vmul.f32 %v69, %v199
    %v202 = vmul.f32 %v70, %v199
    %203 = vset.pattern.permute.xlu0 6
    %204 = vperm.xlu0 %203, %v46
    %v205 = vpop.permute.xlu0 %204
    %v207 = vmul.f32 %v91, %v205
    %v208 = vmul.f32 %v92, %v205
    %v209 = vadd.f32 %v201, %v207
    %v210 = vadd.f32 %v202, %v208
    %211 = vset.pattern.permute.xlu0 7
    %212 = vperm.xlu0 %211, %v46
    %v213 = vpop.permute.xlu0 %212
    %v215 = vmul.f32 %v44, %v213
    %v216 = vmul.f32 %v45, %v213
    %v217 = vadd.f32 %v209, %v215
    %v218 = vadd.f32 %v210, %v216
    %219 = vset.pattern.permute.xlu0 8
    %220 = vperm.xlu0 %219, %v46
    %v221 = vpop.permute.xlu0 %220
    %v223 = vmul.f32 %v113, %v221
    %v224 = vmul.f32 %v114, %v221
    %v225 = vadd.f32 %v217, %v223
    %v226 = vadd.f32 %v218, %v224
    %227 = vset.pattern.permute.xlu0 9
    %228 = vperm.xlu0 %227, %v46
    %v229 = vpop.permute.xlu0 %228
    %v231 = vmul.f32 %v135, %v229
    %v232 = vmul.f32 %v136, %v229
    %v233 = vadd.f32 %v225, %v231
    %v234 = vadd.f32 %v226, %v232
    %235 = vrot.lane.b32.xlu0 %v233, 16
    %v236 = vpop.permute.xlu0 %235
    %237 = vrot.lane.b32.xlu0 %v234, 16
    %v238 = vpop.permute.xlu0 %237
    %vm239 = vcmp.lt.s32.totalorder %v52, 16
    %v240 = vsel %vm239, %v236, %v238
    %v241 = vsel %vm239, %v238, %v236
    %s242 = scalar_lea.vmem [#allocation5], 1
    %v243 = vld [vmem:[%s242] ss:$8 sm:$0x3]
    %v245 = vlaneseq
    %v246 = vshrl.u32 %v245, 7
    %v247 = vsub.s32 0, %v246
    %v248 = vrot.slane %v243, %v247
    %v249 = vlaneseq
    %v250 = vshrl.u32 %v249, 7
    %v251 = vsub.s32 1, %v250
    %v252 = vrot.slane %v243, %v251
    %v255 = vmul.f32 %v241, %v248
    %v256 = vmul.f32 %v240, %v252
    %v257 = vadd.f32 %v195, %v255
    %v258 = vadd.f32 %v196, %v256
    %259 = vset.pattern.permute.xlu0 10
    %260 = vperm.xlu0 %259, %v46
    %v261 = vpop.permute.xlu0 %260
    %v263 = vmul.f32 %v69, %v261
    %v264 = vmul.f32 %v70, %v261
    %265 = vset.pattern.permute.xlu0 11
    %266 = vperm.xlu0 %265, %v46
    %v267 = vpop.permute.xlu0 %266
    %v269 = vmul.f32 %v91, %v267
    %v270 = vmul.f32 %v92, %v267
    %v271 = vadd.f32 %v263, %v269
    %v272 = vadd.f32 %v264, %v270
    %273 = vset.pattern.permute.xlu0 12
    %274 = vperm.xlu0 %273, %v46
    %v275 = vpop.permute.xlu0 %274
    %v277 = vmul.f32 %v44, %v275
    %v278 = vmul.f32 %v45, %v275
    %v279 = vadd.f32 %v271, %v277
    %v280 = vadd.f32 %v272, %v278
    %281 = vset.pattern.permute.xlu0 13
    %282 = vperm.xlu0 %281, %v46
    %v283 = vpop.permute.xlu0 %282
    %v285 = vmul.f32 %v113, %v283
    %v286 = vmul.f32 %v114, %v283
    %v287 = vadd.f32 %v279, %v285
    %v288 = vadd.f32 %v280, %v286
    %289 = vset.pattern.permute.xlu0 14
    %290 = vperm.xlu0 %289, %v46
    %v291 = vpop.permute.xlu0 %290
    %v293 = vmul.f32 %v135, %v291
    %v294 = vmul.f32 %v136, %v291
    %v295 = vadd.f32 %v287, %v293
    %v296 = vadd.f32 %v288, %v294
    %v297 = vadd.f32 %v257, %v295
    %v298 = vadd.f32 %v258, %v296
    %299 = vset.pattern.permute.xlu0 15
    %300 = vperm.xlu0 %299, %v46
    %v301 = vpop.permute.xlu0 %300
    %v303 = vmul.f32 %v69, %v301
    %v304 = vmul.f32 %v70, %v301
    %305 = vset.pattern.permute.xlu0 16
    %306 = vperm.xlu0 %305, %v46
    %v307 = vpop.permute.xlu0 %306
    %v309 = vmul.f32 %v91, %v307
    %v310 = vmul.f32 %v92, %v307
    %v311 = vadd.f32 %v303, %v309
    %v312 = vadd.f32 %v304, %v310
    %313 = vset.pattern.permute.xlu0 17
    %314 = vperm.xlu0 %313, %v46
    %v315 = vpop.permute.xlu0 %314
    %v317 = vmul.f32 %v44, %v315
    %v318 = vmul.f32 %v45, %v315
    %v319 = vadd.f32 %v311, %v317
    %v320 = vadd.f32 %v312, %v318
    %321 = vset.pattern.permute.xlu0 18
    %322 = vperm.xlu0 %321, %v46
    %v323 = vpop.permute.xlu0 %322
    %v325 = vmul.f32 %v113, %v323
    %v326 = vmul.f32 %v114, %v323
    %v327 = vadd.f32 %v319, %v325
    %v328 = vadd.f32 %v320, %v326
    %329 = vset.pattern.permute.xlu0 19
    %330 = vperm.xlu0 %329, %v46
    %v331 = vpop.permute.xlu0 %330
    %v333 = vmul.f32 %v135, %v331
    %v334 = vmul.f32 %v136, %v331
    %v335 = vadd.f32 %v327, %v333
    %v336 = vadd.f32 %v328, %v334
    %337 = vrot.lane.b32.xlu0 %v335, 112
    %v338 = vpop.permute.xlu0 %337
    %339 = vrot.lane.b32.xlu0 %v336, 112
    %v340 = vpop.permute.xlu0 %339
    %vm341 = vcmp.lt.s32.totalorder %v52, 112
    %v342 = vsel %vm341, %v338, %v340
    %v343 = vsel %vm341, %v340, %v338
    %s344 = scalar_lea.vmem [#allocation5], 3
    %v345 = vld [vmem:[%s344] ss:$8 sm:$0x3]
    %v347 = vlaneseq
    %v348 = vshrl.u32 %v347, 7
    %v349 = vsub.s32 0, %v348
    %v350 = vrot.slane %v345, %v349
    %v351 = vlaneseq
    %v352 = vshrl.u32 %v351, 7
    %v353 = vsub.s32 1, %v352
    %v354 = vrot.slane %v345, %v353
    %v357 = vmul.f32 %v342, %v350
    %v358 = vmul.f32 %v343, %v354
    %v359 = vadd.f32 %v297, %v357
    %v360 = vadd.f32 %v298, %v358
    %361 = vset.pattern.permute.xlu0 20
    %362 = vperm.xlu0 %361, %v46
    %v363 = vpop.permute.xlu0 %362
    %v365 = vmul.f32 %v69, %v363
    %v366 = vmul.f32 %v70, %v363
    %367 = vset.pattern.permute.xlu0 21
    %368 = vperm.xlu0 %367, %v46
    %v369 = vpop.permute.xlu0 %368
    %v371 = vmul.f32 %v91, %v369
    %v372 = vmul.f32 %v92, %v369
    %v373 = vadd.f32 %v365, %v371
    %v374 = vadd.f32 %v366, %v372
    %375 = vset.pattern.permute.xlu0 22
    %376 = vperm.xlu0 %375, %v46
    %v377 = vpop.permute.xlu0 %376
    %v379 = vmul.f32 %v44, %v377
    %v380 = vmul.f32 %v45, %v377
    %v381 = vadd.f32 %v373, %v379
    %v382 = vadd.f32 %v374, %v380
    %383 = vset.pattern.permute.xlu0 23
    %384 = vperm.xlu0 %383, %v46
    %v385 = vpop.permute.xlu0 %384
    %v387 = vmul.f32 %v113, %v385
    %v388 = vmul.f32 %v114, %v385
    %v389 = vadd.f32 %v381, %v387
    %v390 = vadd.f32 %v382, %v388
    %391 = vset.pattern.permute.xlu0 24
    %392 = vperm.xlu0 %391, %v46
    %v393 = vpop.permute.xlu0 %392
    %v395 = vmul.f32 %v135, %v393
    %v396 = vmul.f32 %v136, %v393
    %v397 = vadd.f32 %v389, %v395
    %v398 = vadd.f32 %v390, %v396
    %399 = vrot.lane.b32.xlu0 %v397, 96
    %v400 = vpop.permute.xlu0 %399
    %401 = vrot.lane.b32.xlu0 %v398, 96
    %v402 = vpop.permute.xlu0 %401
    %vm403 = vcmp.lt.s32.totalorder %v52, 96
    %v404 = vsel %vm403, %v400, %v402
    %v405 = vsel %vm403, %v402, %v400
    %s406 = scalar_lea.vmem [#allocation5], 4
    %v407 = vld [vmem:[%s406] ss:$8 sm:$0x3]
    %v409 = vlaneseq
    %v410 = vshrl.u32 %v409, 7
    %v411 = vsub.s32 0, %v410
    %v412 = vrot.slane %v407, %v411
    %v413 = vlaneseq
    %v414 = vshrl.u32 %v413, 7
    %v415 = vsub.s32 1, %v414
    %v416 = vrot.slane %v407, %v415
    %v419 = vmul.f32 %v404, %v412
    %v420 = vmul.f32 %v405, %v416
    %v421 = vadd.f32 %v359, %v419
    %v422 = vadd.f32 %v360, %v420
    %v423 = vld [vmem:[%s2] sm:$0xff]
    %425 = vset.pattern.permute.xlu0 0
    %426 = vperm.xlu0 %425, %v423
    %v427 = vpop.permute.xlu0 %426
    %v429 = vadd.f32 %v421, %v427
    %v430 = vadd.f32 %v422, %v427
    %v431 = vmul.f32 %v429, 0.5
    %v432 = vmul.f32 %v430, 0.5
    %v433 = vtanh.pop %v431
    %v434 = vtanh.pop %v432
    %v435 = vmul.f32 %v433, 0.5
    %v436 = vmul.f32 %v434, 0.5
    %v437 = vadd.f32 %v435, 0.5
    %v438 = vadd.f32 %v436, 0.5
    %v439 = vmul.f32 %v44, %v437
    %v440 = vmul.f32 %v45, %v438
    %441 = vst [vmem:[#allocation7] sm:$0xff] %v439
    %442 = vst [vmem:[#allocation7 + $0x8] sm:$0xff] %v440
    // Predicated region
    $region26: #{tpu_custom_call.1} parent=1 // pred_check
      _
    $region27: #{tpu_custom_call.1} parent=1 // pred_check_branch
      %444 = sbr.rel (0) target = $region29
    $region28: #{tpu_custom_call.1} parent=1 // pred_region
      %s446 = ssub.s32 256, 256
      %447 = vsyncadd [#allocation4], %s446
      %s449 = sshll.u32 [#allocation7], 4
      %s450 = int_to_ptr.vmem [resolvable:$true] %s449
      %452 = dma.vmem_to_hbm [thread:$0]  %s450, 256, %s4, [#allocation4]
    $region29: #{tpu_custom_call.1} parent=1 // pred_fallthru
      _
    // Predicated region
    $region30: #{tpu_custom_call.1} parent=1 // pred_check
      _
    $region31: #{tpu_custom_call.1} parent=1 // pred_check_branch
      %454 = sbr.rel (0) target = $region33
    $region32: #{tpu_custom_call.1} parent=1 // pred_region
      %455 = dma.done [#allocation4], 256
    $region33: #{tpu_custom_call.1} parent=1 // pred_fallthru
      _
    %456 = vsyncpa [#allocation3], 1
    %457 = vsyncpa [#allocation6], 1
    %458 = vsyncpa [#allocation4], 1

</llo_original>
